<compile_context>
chip_gen: v7x
topology: tpu7x:2x2x1
jax: 0.10.0
libtpu: 0.0.40
codegen_flags: <defaults>
</compile_context>

<pallas_src>
import functools

import jax
import jax.numpy as jnp
from jax.experimental import pallas as pl
from jax.experimental.pallas import tpu as pltpu


def _round_up(x, m):
    return (x + m - 1) // m * m


def _pad2(a, rows, cols, dtype):
    """Pad a 2-D array to (rows, cols) and cast; no-op (no extra HBM pass) if already there."""
    if a.shape == (rows, cols) and a.dtype == jnp.dtype(dtype):
        return a
    return jnp.pad(a, ((0, rows - a.shape[0]), (0, cols - a.shape[1]))).astype(dtype)


def _vmem_budget_bytes():
    """Generation-aware usable VMEM budget (leave headroom for compiler scratch)."""
    try:
        phys = int(pltpu.get_tpu_info().vmem_capacity_bytes)
    except Exception:
        phys = 64 * 2**20
    if phys >= 100 * 2**20:      # v5e / v6e: 128 MiB physical VMEM
        return 104 * 2**20
    return 52 * 2**20            # v7x: 64 MiB physical VMEM per TensorCore


def _mlp_kernel(n_hidden_layers, compute_dtype, *refs):
    # refs layout:
    #   x_ref (f32 tile),
    #   (w_ref, b_ref) * n_hidden_layers          -- hidden stack (each followed by ReLU)
    #   w_out_ref, b_out_ref                      -- output head
    #   hid_out_ref, out_out_ref                  -- outputs
    x_ref = refs[0]
    hid_out_ref = refs[-2]
    out_out_ref = refs[-1]

    # f32 -> bf16 cast happens per tile here (no wrapper-side HBM cast pass).
    x = x_ref[...].astype(compute_dtype)
    h_f32 = None

    for layer in range(n_hidden_layers):
        w_ref = refs[1 + 2 * layer]
        b_ref = refs[2 + 2 * layer]
        # MXU matmul in compute_dtype, f32 accumulation; bias-add + ReLU in f32.
        acc = jnp.dot(x, w_ref[...], preferred_element_type=jnp.float32) + b_ref[...]
        h_f32 = jnp.maximum(acc, 0.0)             # ReLU
        x = h_f32.astype(compute_dtype)

    hid_out_ref[...] = h_f32.astype(hid_out_ref.dtype)

    # output head (no activation)
    w_out_ref = refs[1 + 2 * n_hidden_layers]
    b_out_ref = refs[2 + 2 * n_hidden_layers]
    y = jnp.dot(x, w_out_ref[...], preferred_element_type=jnp.float32) + b_out_ref[...]
    out_out_ref[...] = y.astype(out_out_ref.dtype)


def mlp_forward(x, hidden_params, out_params, *, block_batch=1024,
                compute_dtype=jnp.bfloat16, hid_dtype=jnp.float32):
    """Run the fused MLP kernel.

    x:             [batch, input_dim]  float32
    hidden_params: list of (W [in, out], b [1, out]) for each hidden Linear+ReLU
    out_params:    (W_out [hidden, output_dim], b_out [1, output_dim])
    returns:       (hidden_activation [batch, hidden], output [batch, output_dim])
    """
    assert len(hidden_params) >= 1
    n_hidden = len(hidden_params)
    batch, input_dim = x.shape
    hidden_size = hidden_params[-1][0].shape[1]
    output_dim = out_params[0].shape[1]

    # --- lane-dense feature padding (multiples of 128 lanes) -----------------
    in_p = _round_up(input_dim, 128)
    hid_p = _round_up(hidden_size, 128)
    out_p = _round_up(output_dim, 128)

    # --- pad + cast parameters (skipped when already aligned) -----------------
    param_arrays = []
    prev = in_p
    for w, b in hidden_params:
        param_arrays.append(_pad2(w, prev, hid_p, compute_dtype))
        param_arrays.append(_pad2(b, 1, hid_p, jnp.float32))
        prev = hid_p
    w_out, b_out = out_params
    param_arrays.append(_pad2(w_out, hid_p, out_p, compute_dtype))
    param_arrays.append(_pad2(b_out, 1, out_p, jnp.float32))
    param_bytes = sum(int(a.size) * a.dtype.itemsize for a in param_arrays)

    # --- VMEM budget (generation-aware) ---------------------------------------
    vmem_cap = _vmem_budget_bytes()
    margin = 2 * 2**20
    hid_item = jnp.dtype(hid_dtype).itemsize
    # per-row VMEM cost of the pipelined activation tiles (+ in-kernel temporaries)
    bytes_per_row = (2 * 4 * in_p            # x tile, double-buffered f32
                     + 2 * hid_item * hid_p  # hid output tile, double-buffered
                     + 2 * 4 * out_p         # out output tile, double-buffered f32
                     + 6 * hid_p)            # approx f32 + bf16 in-kernel temporaries

    if param_bytes + margin + 16 * bytes_per_row > vmem_cap:
        # TODO(synk): weight-streaming path (memory_space=pl.ANY + pltpu.emit_pipeline)
        raise NotImplementedError(
            f"Resident-weight MLP kernel does not fit VMEM on this chip: weights need "
            f"~{param_bytes / 2**20:.1f} MiB, budget {vmem_cap / 2**20:.0f} MiB. "
            f"Weight streaming is not implemented yet.")

    # --- batch tiling ----------------------------------------------------------
    tb_vmem = max(16, int((vmem_cap - margin - param_bytes) // bytes_per_row) // 16 * 16)
    tb_cap = int(min(block_batch, tb_vmem))

    batch_min_p = _round_up(batch, 16)
    # >= 2 programs whenever batch allows (both v7x TensorCores get work), and balance
    # the tile size across the real batch so zero-padding waste stays near zero.
    n_tiles = max(2 if batch_min_p >= 32 else 1, pl.cdiv(batch_min_p, tb_cap))
    tb = _round_up(pl.cdiv(batch, n_tiles), 16)
    while tb > tb_cap:
        n_tiles += 1
        tb = _round_up(pl.cdiv(batch, n_tiles), 16)
    batch_p = _round_up(batch, tb)
    grid = (batch_p // tb,)

    # --- input (kept f32; cast to bf16 per tile inside the kernel) -------------
    if batch_p != batch or in_p != input_dim:
        x_in = jnp.pad(x, ((0, batch_p - batch), (0, in_p - input_dim)))
    else:
        x_in = x
    flat_inputs = [x_in] + param_arrays

    # --- cost estimate ----------------------------------------------------------
    flops = 2 * batch_p * (in_p * hid_p + (n_hidden - 1) * hid_p * hid_p + hid_p * out_p)
    io_bytes = (int(x_in.size) * x_in.dtype.itemsize
                + param_bytes
                + batch_p * hid_p * hid_item + batch_p * out_p * 4)
    cost = pl.CostEstimate(flops=int(flops), transcendentals=0, bytes_accessed=int(io_bytes))

    out_specs = (pl.BlockSpec((tb, hid_p), lambda i: (i, 0)),
                 pl.BlockSpec((tb, out_p), lambda i: (i, 0)))
    out_shape = (jax.ShapeDtypeStruct((batch_p, hid_p), hid_dtype),
                 jax.ShapeDtypeStruct((batch_p, out_p), jnp.float32))

    kernel = functools.partial(_mlp_kernel, n_hidden, compute_dtype)

    def _call(single_buffer_weights):
        if single_buffer_weights:
            # Constant index_map + Buffered(1): weights DMA'd once, single VMEM buffer.
            w_specs = [pl.BlockSpec(a.shape, lambda i: (0, 0), pipeline_mode=pl.Buffered(1))
                       for a in param_arrays]
            weight_buf = 1
        else:
            w_specs = [pl.BlockSpec(a.shape, lambda i: (0, 0)) for a in param_arrays]
            weight_buf = 2

        in_specs = [pl.BlockSpec((tb, in_p), lambda i: (i, 0))] + w_specs

        act_tile_bytes = tb * bytes_per_row
        vmem_need = weight_buf * param_bytes + act_tile_bytes
        vmem_limit = int(min(vmem_cap, max(32 * 2**20, int(vmem_need * 1.25) + (2 << 20))))

        return pl.pallas_call(
            kernel,
            grid=grid,
            in_specs=in_specs,
            out_specs=out_specs,
            out_shape=out_shape,
            compiler_params=pltpu.CompilerParams(
                dimension_semantics=("parallel",),
                vmem_limit_bytes=vmem_limit,
            ),
            cost_estimate=cost,
        )(*flat_inputs)

    try:
        hid_pad, out_pad = _call(True)
    except NotImplementedError:
        raise
    except Exception:
        # Fallback if this jax version rejects pipeline_mode=pl.Buffered(1).
        hid_pad, out_pad = _call(False)

    # --- slice back only when padding was introduced ----------------------------
    hid = hid_pad if (batch_p == batch and hid_p == hidden_size) else hid_pad[:batch, :hidden_size]
    out = out_pad if (batch_p == batch and out_p == output_dim) else out_pad[:batch, :output_dim]
    return hid, out


def init_params(key, input_dim, output_dim, hidden_size, hidden_layers):
    """Deterministic parameter init (mirrors nn.Linear shapes, stored transposed [in, out])."""
    hidden_params = []
    in_dim = input_dim
    for _ in range(hidden_layers):
        key, kw, kb = jax.random.split(key, 3)
        bound = 1.0 / jnp.sqrt(in_dim)
        w = jax.random.uniform(kw, (in_dim, hidden_size), jnp.float32, -bound, bound)
        b = jax.random.uniform(kb, (1, hidden_size), jnp.float32, -bound, bound)
        hidden_params.append((w, b))
        in_dim = hidden_size
    key, kw, kb = jax.random.split(key, 3)
    bound = 1.0 / jnp.sqrt(hidden_size)
    w_out = jax.random.uniform(kw, (hidden_size, output_dim), jnp.float32, -bound, bound)
    b_out = jax.random.uniform(kb, (1, output_dim), jnp.float32, -bound, bound)
    return hidden_params, (w_out, b_out)


def mlp_reference(x, hidden_params, out_params, compute_dtype=jnp.float32):
    """Pure-JAX reference; optionally emulates the kernel's bf16 matmul inputs."""
    h = x
    for w, b in hidden_params:
        acc = jnp.dot(h.astype(compute_dtype), w.astype(compute_dtype),
                      preferred_element_type=jnp.float32) + b
        h = jnp.maximum(acc, 0.0)
    y = jnp.dot(h.astype(compute_dtype), out_params[0].astype(compute_dtype),
                preferred_element_type=jnp.float32) + out_params[1]
    return h, y


if __name__ == "__main__":
    # Small shapes consistent with the module's forward:
    batch, input_dim, hidden_size, hidden_layers, output_dim = 8, 4, 32, 2, 3

    key = jax.random.PRNGKey(0)
    key, kx = jax.random.split(key)
    x = jax.random.normal(kx, (batch, input_dim), jnp.float32)

    hidden_params, out_params = init_params(
        key, input_dim, output_dim, hidden_size, hidden_layers
    )

    hid, out = mlp_forward(x, hidden_params, out_params)
    jax.block_until_ready((hid, out))
    assert hid.shape == (batch, hidden_size) and out.shape == (batch, output_dim)

    # Tight check against a bf16-matmul-emulating reference.
    hid_bf, out_bf = mlp_reference(x, hidden_params, out_params, jnp.bfloat16)
    assert jnp.allclose(hid, hid_bf, atol=1e-3, rtol=1e-3)
    assert jnp.allclose(out, out_bf, atol=1e-3, rtol=1e-3)

    # Loose check against the exact f32 module semantics (bf16 MXU rounding only).
    hid_f32, out_f32 = mlp_reference(x, hidden_params, out_params, jnp.float32)
    assert jnp.allclose(hid, hid_f32, atol=5e-2, rtol=5e-2)
    assert jnp.allclose(out, out_f32, atol=5e-2, rtol=5e-2)

    print("KERNEL_OK")
</pallas_src>

<mosaic_0001>
module attributes {stable_mosaic.version = 11 : i64} {
  func.func @_mlp_kernel(%arg0: i32, %arg1: memref<16x128xf32, #tpu.memory_space<vmem>>, %arg2: memref<128x128xbf16, #tpu.memory_space<vmem>>, %arg3: memref<1x128xf32, #tpu.memory_space<vmem>>, %arg4: memref<128x128xbf16, #tpu.memory_space<vmem>>, %arg5: memref<1x128xf32, #tpu.memory_space<vmem>>, %arg6: memref<128x128xbf16, #tpu.memory_space<vmem>>, %arg7: memref<1x128xf32, #tpu.memory_space<vmem>>, %arg8: memref<16x128xf32, #tpu.memory_space<vmem>>, %arg9: memref<16x128xf32, #tpu.memory_space<vmem>>) attributes {dimension_semantics = [#tpu.dimension_semantics<parallel>], iteration_bounds = array<i64: 1>, scalar_prefetch = 0 : i64, scratch_operands = 0 : i64, tpu.core_type = #tpu.core_type<tc>, window_params = [{transform_indices = @transform_0, window_bounds = array<i64: 16, 128>}, {pipeline_mode = #tpu.pipeline_mode<synchronous>, transform_indices = @transform_1, window_bounds = array<i64: 128, 128>}, {pipeline_mode = #tpu.pipeline_mode<synchronous>, transform_indices = @transform_2, window_bounds = array<i64: 1, 128>}, {pipeline_mode = #tpu.pipeline_mode<synchronous>, transform_indices = @transform_3, window_bounds = array<i64: 128, 128>}, {pipeline_mode = #tpu.pipeline_mode<synchronous>, transform_indices = @transform_4, window_bounds = array<i64: 1, 128>}, {pipeline_mode = #tpu.pipeline_mode<synchronous>, transform_indices = @transform_5, window_bounds = array<i64: 128, 128>}, {pipeline_mode = #tpu.pipeline_mode<synchronous>, transform_indices = @transform_6, window_bounds = array<i64: 1, 128>}, {transform_indices = @transform_7, window_bounds = array<i64: 16, 128>}, {transform_indices = @transform_8, window_bounds = array<i64: 16, 128>}]} {
    %c0 = arith.constant 0 : index
    %c0_0 = arith.constant 0 : index
    %0 = vector.load %arg1[%c0, %c0_0] : memref<16x128xf32, #tpu.memory_space<vmem>>, vector<16x128xf32>
    %1 = arith.truncf %0 : vector<16x128xf32> to vector<16x128xbf16>
    %c0_1 = arith.constant 0 : index
    %c0_2 = arith.constant 0 : index
    %2 = vector.load %arg2[%c0_1, %c0_2] : memref<128x128xbf16, #tpu.memory_space<vmem>>, vector<128x128xbf16>
    %cst = arith.constant dense<0.000000e+00> : vector<16x128xf32>
    %3 = tpu.matmul %1, %2, %cst {dimension_numbers = #tpu.dot_dimension_numbers<[1], [0], [0], [1], [0, 0, 1, 1], [], []>} : vector<16x128xbf16>, vector<128x128xbf16>, vector<16x128xf32> -> vector<16x128xf32>
    %c0_3 = arith.constant 0 : index
    %c0_4 = arith.constant 0 : index
    %4 = vector.load %arg3[%c0_3, %c0_4] : memref<1x128xf32, #tpu.memory_space<vmem>>, vector<1x128xf32>
    %5 = vector.broadcast %4 : vector<1x128xf32> to vector<16x128xf32>
    %6 = arith.addf %3, %5 : vector<16x128xf32>
    %cst_5 = arith.constant 0.000000e+00 : f32
    %7 = vector.broadcast %cst_5 : f32 to vector<16x128xf32>
    %8 = arith.maximumf %6, %7 : vector<16x128xf32>
    %9 = arith.truncf %8 : vector<16x128xf32> to vector<16x128xbf16>
    %c0_6 = arith.constant 0 : index
    %c0_7 = arith.constant 0 : index
    %10 = vector.load %arg4[%c0_6, %c0_7] : memref<128x128xbf16, #tpu.memory_space<vmem>>, vector<128x128xbf16>
    %cst_8 = arith.constant dense<0.000000e+00> : vector<16x128xf32>
    %11 = tpu.matmul %9, %10, %cst_8 {dimension_numbers = #tpu.dot_dimension_numbers<[1], [0], [0], [1], [0, 0, 1, 1], [], []>} : vector<16x128xbf16>, vector<128x128xbf16>, vector<16x128xf32> -> vector<16x128xf32>
    %c0_9 = arith.constant 0 : index
    %c0_10 = arith.constant 0 : index
    %12 = vector.load %arg5[%c0_9, %c0_10] : memref<1x128xf32, #tpu.memory_space<vmem>>, vector<1x128xf32>
    %13 = vector.broadcast %12 : vector<1x128xf32> to vector<16x128xf32>
    %14 = arith.addf %11, %13 : vector<16x128xf32>
    %cst_11 = arith.constant 0.000000e+00 : f32
    %15 = vector.broadcast %cst_11 : f32 to vector<16x128xf32>
    %16 = arith.maximumf %14, %15 : vector<16x128xf32>
    %17 = arith.truncf %16 : vector<16x128xf32> to vector<16x128xbf16>
    %c0_12 = arith.constant 0 : index
    %c0_13 = arith.constant 0 : index
    %18 = vector.load %arg8[%c0_12, %c0_13] : memref<16x128xf32, #tpu.memory_space<vmem>>, vector<16x128xf32>
    tpu.vector_store %arg8[%c0_12, %c0_13], %16 {strides = array<i32>} : memref<16x128xf32, #tpu.memory_space<vmem>>, vector<16x128xf32>,
    %c0_14 = arith.constant 0 : index
    %c0_15 = arith.constant 0 : index
    %19 = vector.load %arg6[%c0_14, %c0_15] : memref<128x128xbf16, #tpu.memory_space<vmem>>, vector<128x128xbf16>
    %cst_16 = arith.constant dense<0.000000e+00> : vector<16x128xf32>
    %20 = tpu.matmul %17, %19, %cst_16 {dimension_numbers = #tpu.dot_dimension_numbers<[1], [0], [0], [1], [0, 0, 1, 1], [], []>} : vector<16x128xbf16>, vector<128x128xbf16>, vector<16x128xf32> -> vector<16x128xf32>
    %c0_17 = arith.constant 0 : index
    %c0_18 = arith.constant 0 : index
    %21 = vector.load %arg7[%c0_17, %c0_18] : memref<1x128xf32, #tpu.memory_space<vmem>>, vector<1x128xf32>
    %22 = vector.broadcast %21 : vector<1x128xf32> to vector<16x128xf32>
    %23 = arith.addf %20, %22 : vector<16x128xf32>
    %c0_19 = arith.constant 0 : index
    %c0_20 = arith.constant 0 : index
    %24 = vector.load %arg9[%c0_19, %c0_20] : memref<16x128xf32, #tpu.memory_space<vmem>>, vector<16x128xf32>
    tpu.vector_store %arg9[%c0_19, %c0_20], %23 {strides = array<i32>} : memref<16x128xf32, #tpu.memory_space<vmem>>, vector<16x128xf32>,
    return
  }
  func.func @transform_0(%arg0: i32) -> (i32, i32) {
    %c0_i32 = arith.constant 0 : i32
    %c0_i32_0 = arith.constant 0 : i32
    return %arg0, %c0_i32 : i32, i32
  }
  func.func @transform_1(%arg0: i32) -> (i32, i32) {
    %c0_i32 = arith.constant 0 : i32
    %c0_i32_0 = arith.constant 0 : i32
    %c0_i32_1 = arith.constant 0 : i32
    return %c0_i32, %c0_i32_0 : i32, i32
  }
  func.func @transform_2(%arg0: i32) -> (i32, i32) {
    %c0_i32 = arith.constant 0 : i32
    %c0_i32_0 = arith.constant 0 : i32
    %c0_i32_1 = arith.constant 0 : i32
    return %c0_i32, %c0_i32_0 : i32, i32
  }
  func.func @transform_3(%arg0: i32) -> (i32, i32) {
    %c0_i32 = arith.constant 0 : i32
    %c0_i32_0 = arith.constant 0 : i32
    %c0_i32_1 = arith.constant 0 : i32
    return %c0_i32, %c0_i32_0 : i32, i32
  }
  func.func @transform_4(%arg0: i32) -> (i32, i32) {
    %c0_i32 = arith.constant 0 : i32
    %c0_i32_0 = arith.constant 0 : i32
    %c0_i32_1 = arith.constant 0 : i32
    return %c0_i32, %c0_i32_0 : i32, i32
  }
  func.func @transform_5(%arg0: i32) -> (i32, i32) {
    %c0_i32 = arith.constant 0 : i32
    %c0_i32_0 = arith.constant 0 : i32
    %c0_i32_1 = arith.constant 0 : i32
    return %c0_i32, %c0_i32_0 : i32, i32
  }
  func.func @transform_6(%arg0: i32) -> (i32, i32) {
    %c0_i32 = arith.constant 0 : i32
    %c0_i32_0 = arith.constant 0 : i32
    %c0_i32_1 = arith.constant 0 : i32
    return %c0_i32, %c0_i32_0 : i32, i32
  }
  func.func @transform_7(%arg0: i32) -> (i32, i32) {
    %c0_i32 = arith.constant 0 : i32
    %c0_i32_0 = arith.constant 0 : i32
    return %arg0, %c0_i32 : i32, i32
  }
  func.func @transform_8(%arg0: i32) -> (i32, i32) {
    %c0_i32 = arith.constant 0 : i32
    %c0_i32_0 = arith.constant 0 : i32
    return %arg0, %c0_i32 : i32, i32
  }
}

module attributes {stable_mosaic.version = 11 : i64} {
  func.func @_mlp_kernel(%arg0: i32, %arg1: memref<16x128xf32, #tpu.memory_space<vmem>>, %arg2: memref<128x128xbf16, #tpu.memory_space<vmem>>, %arg3: memref<1x128xf32, #tpu.memory_space<vmem>>, %arg4: memref<128x128xbf16, #tpu.memory_space<vmem>>, %arg5: memref<1x128xf32, #tpu.memory_space<vmem>>, %arg6: memref<128x128xbf16, #tpu.memory_space<vmem>>, %arg7: memref<1x128xf32, #tpu.memory_space<vmem>>, %arg8: memref<16x128xf32, #tpu.memory_space<vmem>>, %arg9: memref<16x128xf32, #tpu.memory_space<vmem>>) attributes {dimension_semantics = [#tpu.dimension_semantics<parallel>], iteration_bounds = array<i64: 1>, scalar_prefetch = 0 : i64, scratch_operands = 0 : i64, tpu.core_type = #tpu.core_type<tc>, window_params = [{transform_indices = @transform_0, window_bounds = array<i64: 16, 128>}, {pipeline_mode = #tpu.pipeline_mode<synchronous>, transform_indices = @transform_1, window_bounds = array<i64: 128, 128>}, {pipeline_mode = #tpu.pipeline_mode<synchronous>, transform_indices = @transform_2, window_bounds = array<i64: 1, 128>}, {pipeline_mode = #tpu.pipeline_mode<synchronous>, transform_indices = @transform_3, window_bounds = array<i64: 128, 128>}, {pipeline_mode = #tpu.pipeline_mode<synchronous>, transform_indices = @transform_4, window_bounds = array<i64: 1, 128>}, {pipeline_mode = #tpu.pipeline_mode<synchronous>, transform_indices = @transform_5, window_bounds = array<i64: 128, 128>}, {pipeline_mode = #tpu.pipeline_mode<synchronous>, transform_indices = @transform_6, window_bounds = array<i64: 1, 128>}, {transform_indices = @transform_7, window_bounds = array<i64: 16, 128>}, {transform_indices = @transform_8, window_bounds = array<i64: 16, 128>}]} {
    %c0 = arith.constant 0 : index
    %c0_0 = arith.constant 0 : index
    %0 = vector.load %arg1[%c0, %c0_0] : memref<16x128xf32, #tpu.memory_space<vmem>>, vector<16x128xf32>
    %1 = arith.truncf %0 : vector<16x128xf32> to vector<16x128xbf16>
    %c0_1 = arith.constant 0 : index
    %c0_2 = arith.constant 0 : index
    %2 = vector.load %arg2[%c0_1, %c0_2] : memref<128x128xbf16, #tpu.memory_space<vmem>>, vector<128x128xbf16>
    %cst = arith.constant dense<0.000000e+00> : vector<16x128xf32>
    %3 = tpu.matmul %1, %2, %cst {dimension_numbers = #tpu.dot_dimension_numbers<[1], [0], [0], [1], [0, 0, 1, 1], [], []>} : vector<16x128xbf16>, vector<128x128xbf16>, vector<16x128xf32> -> vector<16x128xf32>
    %c0_3 = arith.constant 0 : index
    %c0_4 = arith.constant 0 : index
    %4 = vector.load %arg3[%c0_3, %c0_4] : memref<1x128xf32, #tpu.memory_space<vmem>>, vector<1x128xf32>
    %5 = vector.broadcast %4 : vector<1x128xf32> to vector<16x128xf32>
    %6 = arith.addf %3, %5 : vector<16x128xf32>
    %cst_5 = arith.constant 0.000000e+00 : f32
    %7 = vector.broadcast %cst_5 : f32 to vector<16x128xf32>
    %8 = arith.maximumf %6, %7 : vector<16x128xf32>
    %9 = arith.truncf %8 : vector<16x128xf32> to vector<16x128xbf16>
    %c0_6 = arith.constant 0 : index
    %c0_7 = arith.constant 0 : index
    %10 = vector.load %arg4[%c0_6, %c0_7] : memref<128x128xbf16, #tpu.memory_space<vmem>>, vector<128x128xbf16>
    %cst_8 = arith.constant dense<0.000000e+00> : vector<16x128xf32>
    %11 = tpu.matmul %9, %10, %cst_8 {dimension_numbers = #tpu.dot_dimension_numbers<[1], [0], [0], [1], [0, 0, 1, 1], [], []>} : vector<16x128xbf16>, vector<128x128xbf16>, vector<16x128xf32> -> vector<16x128xf32>
    %c0_9 = arith.constant 0 : index
    %c0_10 = arith.constant 0 : index
    %12 = vector.load %arg5[%c0_9, %c0_10] : memref<1x128xf32, #tpu.memory_space<vmem>>, vector<1x128xf32>
    %13 = vector.broadcast %12 : vector<1x128xf32> to vector<16x128xf32>
    %14 = arith.addf %11, %13 : vector<16x128xf32>
    %cst_11 = arith.constant 0.000000e+00 : f32
    %15 = vector.broadcast %cst_11 : f32 to vector<16x128xf32>
    %16 = arith.maximumf %14, %15 : vector<16x128xf32>
    %17 = arith.truncf %16 : vector<16x128xf32> to vector<16x128xbf16>
    %c0_12 = arith.constant 0 : index
    %c0_13 = arith.constant 0 : index
    %18 = vector.load %arg8[%c0_12, %c0_13] : memref<16x128xf32, #tpu.memory_space<vmem>>, vector<16x128xf32>
    tpu.vector_store %arg8[%c0_12, %c0_13], %16 {strides = array<i32>} : memref<16x128xf32, #tpu.memory_space<vmem>>, vector<16x128xf32>,
    %c0_14 = arith.constant 0 : index
    %c0_15 = arith.constant 0 : index
    %19 = vector.load %arg6[%c0_14, %c0_15] : memref<128x128xbf16, #tpu.memory_space<vmem>>, vector<128x128xbf16>
    %cst_16 = arith.constant dense<0.000000e+00> : vector<16x128xf32>
    %20 = tpu.matmul %17, %19, %cst_16 {dimension_numbers = #tpu.dot_dimension_numbers<[1], [0], [0], [1], [0, 0, 1, 1], [], []>} : vector<16x128xbf16>, vector<128x128xbf16>, vector<16x128xf32> -> vector<16x128xf32>
    %c0_17 = arith.constant 0 : index
    %c0_18 = arith.constant 0 : index
    %21 = vector.load %arg7[%c0_17, %c0_18] : memref<1x128xf32, #tpu.memory_space<vmem>>, vector<1x128xf32>
    %22 = vector.broadcast %21 : vector<1x128xf32> to vector<16x128xf32>
    %23 = arith.addf %20, %22 : vector<16x128xf32>
    %c0_19 = arith.constant 0 : index
    %c0_20 = arith.constant 0 : index
    %24 = vector.load %arg9[%c0_19, %c0_20] : memref<16x128xf32, #tpu.memory_space<vmem>>, vector<16x128xf32>
    tpu.vector_store %arg9[%c0_19, %c0_20], %23 {strides = array<i32>} : memref<16x128xf32, #tpu.memory_space<vmem>>, vector<16x128xf32>,
    return
  }
  func.func @transform_0(%arg0: i32) -> (i32, i32) {
    %c0_i32 = arith.constant 0 : i32
    %c0_i32_0 = arith.constant 0 : i32
    return %arg0, %c0_i32 : i32, i32
  }
  func.func @transform_1(%arg0: i32) -> (i32, i32) {
    %c0_i32 = arith.constant 0 : i32
    %c0_i32_0 = arith.constant 0 : i32
    %c0_i32_1 = arith.constant 0 : i32
    return %c0_i32, %c0_i32_0 : i32, i32
  }
  func.func @transform_2(%arg0: i32) -> (i32, i32) {
    %c0_i32 = arith.constant 0 : i32
    %c0_i32_0 = arith.constant 0 : i32
    %c0_i32_1 = arith.constant 0 : i32
    return %c0_i32, %c0_i32_0 : i32, i32
  }
  func.func @transform_3(%arg0: i32) -> (i32, i32) {
    %c0_i32 = arith.constant 0 : i32
    %c0_i32_0 = arith.constant 0 : i32
    %c0_i32_1 = arith.constant 0 : i32
    return %c0_i32, %c0_i32_0 : i32, i32
  }
  func.func @transform_4(%arg0: i32) -> (i32, i32) {
    %c0_i32 = arith.constant 0 : i32
    %c0_i32_0 = arith.constant 0 : i32
    %c0_i32_1 = arith.constant 0 : i32
    return %c0_i32, %c0_i32_0 : i32, i32
  }
  func.func @transform_5(%arg0: i32) -> (i32, i32) {
    %c0_i32 = arith.constant 0 : i32
    %c0_i32_0 = arith.constant 0 : i32
    %c0_i32_1 = arith.constant 0 : i32
    return %c0_i32, %c0_i32_0 : i32, i32
  }
  func.func @transform_6(%arg0: i32) -> (i32, i32) {
    %c0_i32 = arith.constant 0 : i32
    %c0_i32_0 = arith.constant 0 : i32
    %c0_i32_1 = arith.constant 0 : i32
    return %c0_i32, %c0_i32_0 : i32, i32
  }
  func.func @transform_7(%arg0: i32) -> (i32, i32) {
    %c0_i32 = arith.constant 0 : i32
    %c0_i32_0 = arith.constant 0 : i32
    return %arg0, %c0_i32 : i32, i32
  }
  func.func @transform_8(%arg0: i32) -> (i32, i32) {
    %c0_i32 = arith.constant 0 : i32
    %c0_i32_0 = arith.constant 0 : i32
    return %arg0, %c0_i32 : i32, i32
  }
}

</mosaic_0001>

<llo_original>
// kernel: tpu_custom_call.1
$region0: #{tpu_custom_call.1}
  #allocation0 [shape = 'u32[]', space=smem, size = 0x4, offset = 0x4, fixed_abs, tag = 'smem constant byte address 0x4 - core index']
  #allocation1 [shape = 'u32[144,128]{1,0:T(1,128)}', space=vmem, size = 0x12000, scoped, tag = 'internal scratch']
  %s0 = inlined_call_operand.hbm [shape: f32[16,128], index: 0, kind: input, shape index: {}]
  %s1 = inlined_call_operand.hbm [shape: bf16[128,128], index: 1, kind: input, shape index: {}]
  %s2 = inlined_call_operand.vmem [shape: f32[1,128], index: 2, kind: input, shape index: {}]
  %s3 = inlined_call_operand.hbm [shape: bf16[128,128], index: 3, kind: input, shape index: {}]
  %s4 = inlined_call_operand.vmem [shape: f32[1,128], index: 4, kind: input, shape index: {}]
  %s5 = inlined_call_operand.hbm [shape: bf16[128,128], index: 5, kind: input, shape index: {}]
  %s6 = inlined_call_operand.vmem [shape: f32[1,128], index: 6, kind: input, shape index: {}]
  %s7 = inlined_call_operand.hbm [shape: f32[16,128], index: 7, kind: output, shape index: {0}]
  %s8 = inlined_call_operand.hbm [shape: f32[16,128], index: 8, kind: output, shape index: {1}]
  %9 = xla_tuple %s7, %s8
  %s10 = sld [smem:[#allocation0]]
  $region62: #{tpu_custom_call.1} parent=0
    _
  %s12 = ssub.s32 1, %s10
  %s13 = scalar_select 0, %s12, %s10
  $region1: #{tpu_custom_call.1} parent=0
    #allocation2 [shape = 'u8[8192]{0}', space=vmem, size = 0x2000, scoped, tag = 'input window, operand 0, single buffered']
    #allocation3 [shape = 's32[1]{0}', space=sflag, size = 0x4, scoped, tag = 'scoped memory for tpu_custom_call.1']
    #allocation4 [shape = 's32[1]{0}', space=sflag, size = 0x4, scoped, tag = 'scoped memory for tpu_custom_call.1']
    #allocation5 [shape = 'u8[32768]{0}', space=vmem, size = 0x8000, scoped, tag = 'input window, operand 1, single buffered']
    #allocation6 [shape = 's32[1]{0}', space=sflag, size = 0x4, scoped, tag = 'scoped memory for tpu_custom_call.1']
    #allocation7 [shape = 'u8[32768]{0}', space=vmem, size = 0x8000, scoped, tag = 'input window, operand 3, single buffered']
    #allocation8 [shape = 'u8[32768]{0}', space=vmem, size = 0x8000, scoped, tag = 'input window, operand 5, single buffered']
    #allocation9 [shape = 's32[1]{0}', space=sflag, size = 0x4, scoped, tag = 'scoped memory for tpu_custom_call.1']
    #allocation10 [shape = 'u8[8192]{0}', space=vmem, size = 0x2000, scoped, tag = 'output window, operand 0, single buffered']
    #allocation11 [shape = 'u8[8192]{0}', space=vmem, size = 0x2000, scoped, tag = 'output window, operand 1, single buffered']
    #allocation12 [shape = 's32[1]{0}', space=sflag, size = 0x4, scoped, tag = 'scoped memory for tpu_custom_call.1']
    %14 = vsyncpa [#allocation3], 0
    %15 = vsyncpa [#allocation6], 0
    %16 = vsyncpa [#allocation9], 0
    %17 = vsyncpa [#allocation4], 0
    %18 = vsyncpa [#allocation12], 0
    // Predicated region
    $region2: #{tpu_custom_call.1} parent=1 // pred_check
      _
    $region3: #{tpu_custom_call.1} parent=1 // pred_check_branch
      %20 = sbr.rel (0) target = $region5
    $region4: #{tpu_custom_call.1} parent=1 // pred_region
      %s22 = ssub.s32 256, 256
      %23 = vsyncadd [#allocation3], %s22
      %s24 = sshll.u32 [#allocation2], 4
      %s25 = int_to_ptr.vmem [resolvable:$true] %s24
      %30 = dma.hbm_to_vmem [thread:$0]  %s0, 256, %s25, [#allocation3], 128, 128, 8
    $region5: #{tpu_custom_call.1} parent=1 // pred_fallthru
      _
    // Predicated region
    $region6: #{tpu_custom_call.1} parent=1 // pred_check
      _
    $region7: #{tpu_custom_call.1} parent=1 // pred_check_branch
      %32 = sbr.rel (0) target = $region9
    $region8: #{tpu_custom_call.1} parent=1 // pred_region
      %s34 = ssub.s32 1024, 1024
      %35 = vsyncadd [#allocation6], %s34
      %s36 = sshll.u32 [#allocation5], 4
      %s37 = int_to_ptr.vmem [resolvable:$true] %s36
      %42 = dma.hbm_to_vmem [thread:$0]  %s1, 1024, %s37, [#allocation6], 64, 64, 4
    $region9: #{tpu_custom_call.1} parent=1 // pred_fallthru
      _
    // Predicated region
    $region10: #{tpu_custom_call.1} parent=1 // pred_check
      _
    $region11: #{tpu_custom_call.1} parent=1 // pred_check_branch
      %44 = sbr.rel (0) target = $region13
    $region12: #{tpu_custom_call.1} parent=1 // pred_region
      _
    $region13: #{tpu_custom_call.1} parent=1 // pred_fallthru
      _
    // Predicated region
    $region14: #{tpu_custom_call.1} parent=1 // pred_check
      _
    $region15: #{tpu_custom_call.1} parent=1 // pred_check_branch
      %46 = sbr.rel (0) target = $region17
    $region16: #{tpu_custom_call.1} parent=1 // pred_region
      %s48 = ssub.s32 1024, 1024
      %49 = vsyncadd [#allocation6], %s48
      %s50 = sshll.u32 [#allocation7], 4
      %s51 = int_to_ptr.vmem [resolvable:$true] %s50
      %56 = dma.hbm_to_vmem [thread:$0]  %s3, 1024, %s51, [#allocation6], 64, 64, 4
    $region17: #{tpu_custom_call.1} parent=1 // pred_fallthru
      _
    // Predicated region
    $region18: #{tpu_custom_call.1} parent=1 // pred_check
      _
    $region19: #{tpu_custom_call.1} parent=1 // pred_check_branch
      %58 = sbr.rel (0) target = $region21
    $region20: #{tpu_custom_call.1} parent=1 // pred_region
      _
    $region21: #{tpu_custom_call.1} parent=1 // pred_fallthru
      _
    // Predicated region
    $region22: #{tpu_custom_call.1} parent=1 // pred_check
      _
    $region23: #{tpu_custom_call.1} parent=1 // pred_check_branch
      %60 = sbr.rel (0) target = $region25
    $region24: #{tpu_custom_call.1} parent=1 // pred_region
      %s62 = ssub.s32 1024, 1024
      %63 = vsyncadd [#allocation9], %s62
      %s64 = sshll.u32 [#allocation8], 4
      %s65 = int_to_ptr.vmem [resolvable:$true] %s64
      %70 = dma.hbm_to_vmem [thread:$0]  %s5, 1024, %s65, [#allocation9], 64, 64, 4
    $region25: #{tpu_custom_call.1} parent=1 // pred_fallthru
      _
    // Predicated region
    $region26: #{tpu_custom_call.1} parent=1 // pred_check
      _
    $region27: #{tpu_custom_call.1} parent=1 // pred_check_branch
      %72 = sbr.rel (0) target = $region29
    $region28: #{tpu_custom_call.1} parent=1 // pred_region
      _
    $region29: #{tpu_custom_call.1} parent=1 // pred_fallthru
      _
    // Predicated region
    $region30: #{tpu_custom_call.1} parent=1 // pred_check
      _
    $region31: #{tpu_custom_call.1} parent=1 // pred_check_branch
      %74 = sbr.rel (0) target = $region33
    $region32: #{tpu_custom_call.1} parent=1 // pred_region
      %75 = dma.done [#allocation3], 256
    $region33: #{tpu_custom_call.1} parent=1 // pred_fallthru
      _
    // Predicated region
    $region34: #{tpu_custom_call.1} parent=1 // pred_check
      _
    $region35: #{tpu_custom_call.1} parent=1 // pred_check_branch
      %77 = sbr.rel (0) target = $region37
    $region36: #{tpu_custom_call.1} parent=1 // pred_region
      %78 = dma.done [#allocation6], 1024
    $region37: #{tpu_custom_call.1} parent=1 // pred_fallthru
      _
    // Predicated region
    $region38: #{tpu_custom_call.1} parent=1 // pred_check
      _
    $region39: #{tpu_custom_call.1} parent=1 // pred_check_branch
      %80 = sbr.rel (0) target = $region41
    $region40: #{tpu_custom_call.1} parent=1 // pred_region
      %81 = dma.done [#allocation6], 1024
    $region41: #{tpu_custom_call.1} parent=1 // pred_fallthru
      _
    // Predicated region
    $region42: #{tpu_custom_call.1} parent=1 // pred_check
      _
    $region43: #{tpu_custom_call.1} parent=1 // pred_check_branch
      %83 = sbr.rel (0) target = $region45
    $region44: #{tpu_custom_call.1} parent=1 // pred_region
      %84 = dma.done [#allocation9], 1024
    $region45: #{tpu_custom_call.1} parent=1 // pred_fallthru
      _
    %v86 = vld [vmem:[#allocation2] sm:$0xff]
    %v87 = vld [vmem:[#allocation2 + $0x8] sm:$0xff]
    %v88 = vpack.c.bf16 %v87, %v86
    %v89 = vld [vmem:[#allocation5] sm:$0xf]
    %v90 = vld [vmem:[#allocation5 + $0x4] sm:$0xf]
    %v91 = vld [vmem:[#allocation5 + $0x8] sm:$0xf]
    %v92 = vld [vmem:[#allocation5 + $0xc] sm:$0xf]
    %v93 = vld [vmem:[#allocation5 + $0x10] sm:$0xf]
    %v94 = vld [vmem:[#allocation5 + $0x14] sm:$0xf]
    %v95 = vld [vmem:[#allocation5 + $0x18] sm:$0xf]
    %v96 = vld [vmem:[#allocation5 + $0x1c] sm:$0xf]
    %v97 = vld [vmem:[#allocation5 + $0x20] sm:$0xf]
    %v98 = vld [vmem:[#allocation5 + $0x24] sm:$0xf]
    %v99 = vld [vmem:[#allocation5 + $0x28] sm:$0xf]
    %v100 = vld [vmem:[#allocation5 + $0x2c] sm:$0xf]
    %v101 = vld [vmem:[#allocation5 + $0x30] sm:$0xf]
    %v102 = vld [vmem:[#allocation5 + $0x34] sm:$0xf]
    %v103 = vld [vmem:[#allocation5 + $0x38] sm:$0xf]
    %v104 = vld [vmem:[#allocation5 + $0x3c] sm:$0xf]
    %v105 = vld [vmem:[%s2] sm:$0x1]
    %v107 = vlaneseq
    %v108 = vshrl.u32 %v107, 7
    %v109 = vsub.s32 0, %v108
    %v110 = vrot.slane %v105, %v109
    %v128 = vunpack.c.l.b16 %v89
    %v129 = vunpack.c.l.b16 %v90
    %v130 = vunpack.c.l.b16 %v91
    %v131 = vunpack.c.l.b16 %v92
    %v132 = vunpack.c.l.b16 %v93
    %v133 = vunpack.c.l.b16 %v94
    %v134 = vunpack.c.l.b16 %v95
    %v135 = vunpack.c.l.b16 %v96
    %v136 = vunpack.c.l.b16 %v97
    %v137 = vunpack.c.l.b16 %v98
    %v138 = vunpack.c.l.b16 %v99
    %v139 = vunpack.c.l.b16 %v100
    %v140 = vunpack.c.l.b16 %v101
    %v141 = vunpack.c.l.b16 %v102
    %v142 = vunpack.c.l.b16 %v103
    %v143 = vunpack.c.l.b16 %v104
    %v144 = vpack.c.b16 %v129, %v128
    %v145 = vpack.c.b16 %v131, %v130
    %v146 = vpack.c.b16 %v133, %v132
    %v147 = vpack.c.b16 %v135, %v134
    %v148 = vpack.c.b16 %v137, %v136
    %v149 = vpack.c.b16 %v139, %v138
    %v150 = vpack.c.b16 %v141, %v140
    %v151 = vpack.c.b16 %v143, %v142
    %160 = vmatprep.subr.bf16.mxu0 0
    %161 = vmatpush1.bf16.msra.mxu0 %v144
    %162 = vmatprep.subr.bf16.mxu0 0
    %163 = vmatpush1.bf16.msra.mxu0 %v145
    %164 = vmatprep.subr.bf16.mxu0 0
    %165 = vmatpush1.bf16.msra.mxu0 %v146
    %166 = vmatprep.subr.bf16.mxu0 0
    %167 = vmatpush1.bf16.msra.mxu0 %v147
    %168 = vmatprep.subr.bf16.mxu0 0
    %169 = vmatpush1.bf16.msra.mxu0 %v148
    %170 = vmatprep.subr.bf16.mxu0 0
    %171 = vmatpush1.bf16.msra.mxu0 %v149
    %172 = vmatprep.subr.bf16.mxu0 0
    %173 = vmatpush1.bf16.msra.mxu0 %v150
    %174 = vmatprep.subr.bf16.mxu0 0
    %175 = vmatpush1.bf16.msra.mxu0 %v151
    %176 = vmatprep.subr.bf16.mxu0 0
    %177 = vmatpush1.bf16.msra.mxu0 0
    %178 = vmatprep.subr.bf16.mxu0 0
    %179 = vmatpush1.bf16.msra.mxu0 0
    %180 = vmatprep.subr.bf16.mxu0 0
    %181 = vmatpush1.bf16.msra.mxu0 0
    %182 = vmatprep.subr.bf16.mxu0 0
    %183 = vmatpush1.bf16.msra.mxu0 0
    %184 = vmatprep.subr.bf16.mxu0 0
    %185 = vmatpush1.bf16.msra.mxu0 0
    %186 = vmatprep.subr.bf16.mxu0 0
    %187 = vmatpush1.bf16.msra.mxu0 0
    %188 = vmatprep.subr.bf16.mxu0 0
    %189 = vmatpush1.bf16.msra.mxu0 0
    %190 = vmatprep.subr.bf16.mxu0 0
    %191 = vmatpush1.bf16.msra.mxu0 0
    %192 = vmatprep.mubr.bf16.mxu0 0
    %193 = vmatmul.mubr.bf16.gmra.mrb[0].mxu0 %v88
    %v194 = vpop.f32.mrb[0].mxu0
    %v195 = vadd.f32 %v110, %v194
    %v196 = vpop.f32.mrb[0].mxu0
    %v197 = vpop.f32.mrb[0].mxu0
    %v198 = vadd.f32 %v110, %v197
    %v199 = vpop.f32.mrb[0].mxu0
    %200 = vdwg.mxu0
    %v201 = vmax.f32 %v195, 0.0
    %v202 = vmax.f32 %v198, 0.0
    %v203 = vpack.c.bf16 %v202, %v201
    %v204 = vld [vmem:[#allocation7] sm:$0xf]
    %v205 = vld [vmem:[#allocation7 + $0x4] sm:$0xf]
    %v206 = vld [vmem:[#allocation7 + $0x8] sm:$0xf]
    %v207 = vld [vmem:[#allocation7 + $0xc] sm:$0xf]
    %v208 = vld [vmem:[#allocation7 + $0x10] sm:$0xf]
    %v209 = vld [vmem:[#allocation7 + $0x14] sm:$0xf]
    %v210 = vld [vmem:[#allocation7 + $0x18] sm:$0xf]
    %v211 = vld [vmem:[#allocation7 + $0x1c] sm:$0xf]
    %v212 = vld [vmem:[#allocation7 + $0x20] sm:$0xf]
    %v213 = vld [vmem:[#allocation7 + $0x24] sm:$0xf]
    %v214 = vld [vmem:[#allocation7 + $0x28] sm:$0xf]
    %v215 = vld [vmem:[#allocation7 + $0x2c] sm:$0xf]
    %v216 = vld [vmem:[#allocation7 + $0x30] sm:$0xf]
    %v217 = vld [vmem:[#allocation7 + $0x34] sm:$0xf]
    %v218 = vld [vmem:[#allocation7 + $0x38] sm:$0xf]
    %v219 = vld [vmem:[#allocation7 + $0x3c] sm:$0xf]
    %v220 = vld [vmem:[%s4] sm:$0x1]
    %v222 = vlaneseq
    %v223 = vshrl.u32 %v222, 7
    %v224 = vsub.s32 0, %v223
    %v225 = vrot.slane %v220, %v224
    %v243 = vunpack.c.l.b16 %v204
    %v244 = vunpack.c.l.b16 %v205
    %v245 = vunpack.c.l.b16 %v206
    %v246 = vunpack.c.l.b16 %v207
    %v247 = vunpack.c.l.b16 %v208
    %v248 = vunpack.c.l.b16 %v209
    %v249 = vunpack.c.l.b16 %v210
    %v250 = vunpack.c.l.b16 %v211
    %v251 = vunpack.c.l.b16 %v212
    %v252 = vunpack.c.l.b16 %v213
    %v253 = vunpack.c.l.b16 %v214
    %v254 = vunpack.c.l.b16 %v215
    %v255 = vunpack.c.l.b16 %v216
    %v256 = vunpack.c.l.b16 %v217
    %v257 = vunpack.c.l.b16 %v218
    %v258 = vunpack.c.l.b16 %v219
    %v259 = vpack.c.b16 %v244, %v243
    %v260 = vpack.c.b16 %v246, %v245
    %v261 = vpack.c.b16 %v248, %v247
    %v262 = vpack.c.b16 %v250, %v249
    %v263 = vpack.c.b16 %v252, %v251
    %v264 = vpack.c.b16 %v254, %v253
    %v265 = vpack.c.b16 %v256, %v255
    %v266 = vpack.c.b16 %v258, %v257
    %275 = vmatprep.subr.bf16.mxu0 0
    %276 = vmatpush1.bf16.msra.mxu0 %v259
    %277 = vmatprep.subr.bf16.mxu0 0
    %278 = vmatpush1.bf16.msra.mxu0 %v260
    %279 = vmatprep.subr.bf16.mxu0 0
    %280 = vmatpush1.bf16.msra.mxu0 %v261
    %281 = vmatprep.subr.bf16.mxu0 0
    %282 = vmatpush1.bf16.msra.mxu0 %v262
    %283 = vmatprep.subr.bf16.mxu0 0
    %284 = vmatpush1.bf16.msra.mxu0 %v263
    %285 = vmatprep.subr.bf16.mxu0 0
    %286 = vmatpush1.bf16.msra.mxu0 %v264
    %287 = vmatprep.subr.bf16.mxu0 0
    %288 = vmatpush1.bf16.msra.mxu0 %v265
    %289 = vmatprep.subr.bf16.mxu0 0
    %290 = vmatpush1.bf16.msra.mxu0 %v266
    %291 = vmatprep.subr.bf16.mxu0 0
    %292 = vmatpush1.bf16.msra.mxu0 0
    %293 = vmatprep.subr.bf16.mxu0 0
    %294 = vmatpush1.bf16.msra.mxu0 0
    %295 = vmatprep.subr.bf16.mxu0 0
    %296 = vmatpush1.bf16.msra.mxu0 0
    %297 = vmatprep.subr.bf16.mxu0 0
    %298 = vmatpush1.bf16.msra.mxu0 0
    %299 = vmatprep.subr.bf16.mxu0 0
    %300 = vmatpush1.bf16.msra.mxu0 0
    %301 = vmatprep.subr.bf16.mxu0 0
    %302 = vmatpush1.bf16.msra.mxu0 0
    %303 = vmatprep.subr.bf16.mxu0 0
    %304 = vmatpush1.bf16.msra.mxu0 0
    %305 = vmatprep.subr.bf16.mxu0 0
    %306 = vmatpush1.bf16.msra.mxu0 0
    %307 = vmatprep.mubr.bf16.mxu0 0
    %308 = vmatmul.mubr.bf16.gmra.mrb[0].mxu0 %v203
    %v309 = vpop.f32.mrb[0].mxu0
    %v310 = vadd.f32 %v225, %v309
    %v311 = vpop.f32.mrb[0].mxu0
    %v312 = vpop.f32.mrb[0].mxu0
    %v313 = vadd.f32 %v225, %v312
    %v314 = vpop.f32.mrb[0].mxu0
    %315 = vdwg.mxu0
    %v316 = vmax.f32 %v310, 0.0
    %v317 = vmax.f32 %v313, 0.0
    %v318 = vpack.c.bf16 %v317, %v316
    %319 = vst [vmem:[#allocation10] sm:$0xff] %v316
    %320 = vst [vmem:[#allocation10 + $0x8] sm:$0xff] %v317
    %v321 = vld [vmem:[#allocation8] sm:$0xf]
    %v322 = vld [vmem:[#allocation8 + $0x4] sm:$0xf]
    %v323 = vld [vmem:[#allocation8 + $0x8] sm:$0xf]
    %v324 = vld [vmem:[#allocation8 + $0xc] sm:$0xf]
    %v325 = vld [vmem:[#allocation8 + $0x10] sm:$0xf]
    %v326 = vld [vmem:[#allocation8 + $0x14] sm:$0xf]
    %v327 = vld [vmem:[#allocation8 + $0x18] sm:$0xf]
    %v328 = vld [vmem:[#allocation8 + $0x1c] sm:$0xf]
    %v329 = vld [vmem:[#allocation8 + $0x20] sm:$0xf]
    %v330 = vld [vmem:[#allocation8 + $0x24] sm:$0xf]
    %v331 = vld [vmem:[#allocation8 + $0x28] sm:$0xf]
    %v332 = vld [vmem:[#allocation8 + $0x2c] sm:$0xf]
    %v333 = vld [vmem:[#allocation8 + $0x30] sm:$0xf]
    %v334 = vld [vmem:[#allocation8 + $0x34] sm:$0xf]
    %v335 = vld [vmem:[#allocation8 + $0x38] sm:$0xf]
    %v336 = vld [vmem:[#allocation8 + $0x3c] sm:$0xf]
    %v337 = vld [vmem:[%s6] sm:$0x1]
    %v339 = vlaneseq
    %v340 = vshrl.u32 %v339, 7
    %v341 = vsub.s32 0, %v340
    %v342 = vrot.slane %v337, %v341
    %v360 = vunpack.c.l.b16 %v321
    %v361 = vunpack.c.l.b16 %v322
    %v362 = vunpack.c.l.b16 %v323
    %v363 = vunpack.c.l.b16 %v324
    %v364 = vunpack.c.l.b16 %v325
    %v365 = vunpack.c.l.b16 %v326
    %v366 = vunpack.c.l.b16 %v327
    %v367 = vunpack.c.l.b16 %v328
    %v368 = vunpack.c.l.b16 %v329
    %v369 = vunpack.c.l.b16 %v330
    %v370 = vunpack.c.l.b16 %v331
    %v371 = vunpack.c.l.b16 %v332
    %v372 = vunpack.c.l.b16 %v333
    %v373 = vunpack.c.l.b16 %v334
    %v374 = vunpack.c.l.b16 %v335
    %v375 = vunpack.c.l.b16 %v336
    %v376 = vpack.c.b16 %v361, %v360
    %v377 = vpack.c.b16 %v363, %v362
    %v378 = vpack.c.b16 %v365, %v364
    %v379 = vpack.c.b16 %v367, %v366
    %v380 = vpack.c.b16 %v369, %v368
    %v381 = vpack.c.b16 %v371, %v370
    %v382 = vpack.c.b16 %v373, %v372
    %v383 = vpack.c.b16 %v375, %v374
    %392 = vmatprep.subr.bf16.mxu0 0
    %393 = vmatpush1.bf16.msra.mxu0 %v376
    %394 = vmatprep.subr.bf16.mxu0 0
    %395 = vmatpush1.bf16.msra.mxu0 %v377
    %396 = vmatprep.subr.bf16.mxu0 0
    %397 = vmatpush1.bf16.msra.mxu0 %v378
    %398 = vmatprep.subr.bf16.mxu0 0
    %399 = vmatpush1.bf16.msra.mxu0 %v379
    %400 = vmatprep.subr.bf16.mxu0 0
    %401 = vmatpush1.bf16.msra.mxu0 %v380
    %402 = vmatprep.subr.bf16.mxu0 0
    %403 = vmatpush1.bf16.msra.mxu0 %v381
    %404 = vmatprep.subr.bf16.mxu0 0
    %405 = vmatpush1.bf16.msra.mxu0 %v382
    %406 = vmatprep.subr.bf16.mxu0 0
    %407 = vmatpush1.bf16.msra.mxu0 %v383
    %408 = vmatprep.subr.bf16.mxu0 0
    %409 = vmatpush1.bf16.msra.mxu0 0
    %410 = vmatprep.subr.bf16.mxu0 0
    %411 = vmatpush1.bf16.msra.mxu0 0
    %412 = vmatprep.subr.bf16.mxu0 0
    %413 = vmatpush1.bf16.msra.mxu0 0
    %414 = vmatprep.subr.bf16.mxu0 0
    %415 = vmatpush1.bf16.msra.mxu0 0
    %416 = vmatprep.subr.bf16.mxu0 0
    %417 = vmatpush1.bf16.msra.mxu0 0
    %418 = vmatprep.subr.bf16.mxu0 0
    %419 = vmatpush1.bf16.msra.mxu0 0
    %420 = vmatprep.subr.bf16.mxu0 0
    %421 = vmatpush1.bf16.msra.mxu0 0
    %422 = vmatprep.subr.bf16.mxu0 0
    %423 = vmatpush1.bf16.msra.mxu0 0
    %424 = vmatprep.mubr.bf16.mxu0 0
    %425 = vmatmul.mubr.bf16.gmra.mrb[0].mxu0 %v318
    %v426 = vpop.f32.mrb[0].mxu0
    %v427 = vadd.f32 %v342, %v426
    %v428 = vpop.f32.mrb[0].mxu0
    %v429 = vpop.f32.mrb[0].mxu0
    %v430 = vadd.f32 %v342, %v429
    %v431 = vpop.f32.mrb[0].mxu0
    %432 = vdwg.mxu0
    %433 = vst [vmem:[#allocation11] sm:$0xff] %v427
    %434 = vst [vmem:[#allocation11 + $0x8] sm:$0xff] %v430
    // Predicated region
    $region46: #{tpu_custom_call.1} parent=1 // pred_check
      _
    $region47: #{tpu_custom_call.1} parent=1 // pred_check_branch
      %436 = sbr.rel (0) target = $region49
    $region48: #{tpu_custom_call.1} parent=1 // pred_region
      %s438 = ssub.s32 256, 256
      %439 = vsyncadd [#allocation4], %s438
      %s440 = sshll.u32 [#allocation10], 4
      %s441 = int_to_ptr.vmem [resolvable:$true] %s440
      %446 = dma.vmem_to_hbm [thread:$0]  %s441, 256, %s7, [#allocation4], 128, 128, 8
    $region49: #{tpu_custom_call.1} parent=1 // pred_fallthru
      _
    // Predicated region
    $region50: #{tpu_custom_call.1} parent=1 // pred_check
      _
    $region51: #{tpu_custom_call.1} parent=1 // pred_check_branch
      %448 = sbr.rel (0) target = $region53
    $region52: #{tpu_custom_call.1} parent=1 // pred_region
      %s450 = ssub.s32 256, 256
      %451 = vsyncadd [#allocation12], %s450
      %s452 = sshll.u32 [#allocation11], 4
      %s453 = int_to_ptr.vmem [resolvable:$true] %s452
      %458 = dma.vmem_to_hbm [thread:$0]  %s453, 256, %s8, [#allocation12], 128, 128, 8
    $region53: #{tpu_custom_call.1} parent=1 // pred_fallthru
      _
    // Predicated region
    $region54: #{tpu_custom_call.1} parent=1 // pred_check
      _
    $region55: #{tpu_custom_call.1} parent=1 // pred_check_branch
      %460 = sbr.rel (0) target = $region57
    $region56: #{tpu_custom_call.1} parent=1 // pred_region
      %461 = dma.done [#allocation4], 256
    $region57: #{tpu_custom_call.1} parent=1 // pred_fallthru
      _
    // Predicated region
    $region58: #{tpu_custom_call.1} parent=1 // pred_check
      _
    $region59: #{tpu_custom_call.1} parent=1 // pred_check_branch
      %463 = sbr.rel (0) target = $region61
    $region60: #{tpu_custom_call.1} parent=1 // pred_region
      %464 = dma.done [#allocation12], 256
    $region61: #{tpu_custom_call.1} parent=1 // pred_fallthru
      _
    %465 = vsyncpa [#allocation3], 1
    %466 = vsyncpa [#allocation6], 1
    %467 = vsyncpa [#allocation9], 1
    %468 = vsyncpa [#allocation4], 1
    %469 = vsyncpa [#allocation12], 1

// kernel: tpu_custom_call.1
$region0: #{tpu_custom_call.1}
  #allocation0 [shape = 'u32[]', space=smem, size = 0x4, offset = 0x4, fixed_abs, tag = 'smem constant byte address 0x4 - core index']
  #allocation1 [shape = 'u32[144,128]{1,0:T(1,128)}', space=vmem, size = 0x12000, scoped, tag = 'internal scratch']
  %s0 = inlined_call_operand.hbm [shape: f32[16,128], index: 0, kind: input, shape index: {}]
  %s1 = inlined_call_operand.hbm [shape: bf16[128,128], index: 1, kind: input, shape index: {}]
  %s2 = inlined_call_operand.vmem [shape: f32[1,128], index: 2, kind: input, shape index: {}]
  %s3 = inlined_call_operand.hbm [shape: bf16[128,128], index: 3, kind: input, shape index: {}]
  %s4 = inlined_call_operand.vmem [shape: f32[1,128], index: 4, kind: input, shape index: {}]
  %s5 = inlined_call_operand.hbm [shape: bf16[128,128], index: 5, kind: input, shape index: {}]
  %s6 = inlined_call_operand.vmem [shape: f32[1,128], index: 6, kind: input, shape index: {}]
  %s7 = inlined_call_operand.hbm [shape: f32[16,128], index: 7, kind: output, shape index: {0}]
  %s8 = inlined_call_operand.hbm [shape: f32[16,128], index: 8, kind: output, shape index: {1}]
  %9 = xla_tuple %s7, %s8
  %s10 = sld [smem:[#allocation0]]
  $region62: #{tpu_custom_call.1} parent=0
    _
  %s12 = ssub.s32 1, %s10
  %s13 = scalar_select 0, %s12, %s10
  $region1: #{tpu_custom_call.1} parent=0
    #allocation2 [shape = 'u8[8192]{0}', space=vmem, size = 0x2000, scoped, tag = 'input window, operand 0, single buffered']
    #allocation3 [shape = 's32[1]{0}', space=sflag, size = 0x4, scoped, tag = 'scoped memory for tpu_custom_call.1']
    #allocation4 [shape = 's32[1]{0}', space=sflag, size = 0x4, scoped, tag = 'scoped memory for tpu_custom_call.1']
    #allocation5 [shape = 'u8[32768]{0}', space=vmem, size = 0x8000, scoped, tag = 'input window, operand 1, single buffered']
    #allocation6 [shape = 's32[1]{0}', space=sflag, size = 0x4, scoped, tag = 'scoped memory for tpu_custom_call.1']
    #allocation7 [shape = 'u8[32768]{0}', space=vmem, size = 0x8000, scoped, tag = 'input window, operand 3, single buffered']
    #allocation8 [shape = 'u8[32768]{0}', space=vmem, size = 0x8000, scoped, tag = 'input window, operand 5, single buffered']
    #allocation9 [shape = 's32[1]{0}', space=sflag, size = 0x4, scoped, tag = 'scoped memory for tpu_custom_call.1']
    #allocation10 [shape = 'u8[8192]{0}', space=vmem, size = 0x2000, scoped, tag = 'output window, operand 0, single buffered']
    #allocation11 [shape = 'u8[8192]{0}', space=vmem, size = 0x2000, scoped, tag = 'output window, operand 1, single buffered']
    #allocation12 [shape = 's32[1]{0}', space=sflag, size = 0x4, scoped, tag = 'scoped memory for tpu_custom_call.1']
    %14 = vsyncpa [#allocation3], 0
    %15 = vsyncpa [#allocation6], 0
    %16 = vsyncpa [#allocation9], 0
    %17 = vsyncpa [#allocation4], 0
    %18 = vsyncpa [#allocation12], 0
    // Predicated region
    $region2: #{tpu_custom_call.1} parent=1 // pred_check
      _
    $region3: #{tpu_custom_call.1} parent=1 // pred_check_branch
      %20 = sbr.rel (0) target = $region5
    $region4: #{tpu_custom_call.1} parent=1 // pred_region
      %s22 = ssub.s32 256, 256
      %23 = vsyncadd [#allocation3], %s22
      %s24 = sshll.u32 [#allocation2], 4
      %s25 = int_to_ptr.vmem [resolvable:$true] %s24
      %30 = dma.hbm_to_vmem [thread:$0]  %s0, 256, %s25, [#allocation3], 128, 128, 8
    $region5: #{tpu_custom_call.1} parent=1 // pred_fallthru
      _
    // Predicated region
    $region6: #{tpu_custom_call.1} parent=1 // pred_check
      _
    $region7: #{tpu_custom_call.1} parent=1 // pred_check_branch
      %32 = sbr.rel (0) target = $region9
    $region8: #{tpu_custom_call.1} parent=1 // pred_region
      %s34 = ssub.s32 1024, 1024
      %35 = vsyncadd [#allocation6], %s34
      %s36 = sshll.u32 [#allocation5], 4
      %s37 = int_to_ptr.vmem [resolvable:$true] %s36
      %42 = dma.hbm_to_vmem [thread:$0]  %s1, 1024, %s37, [#allocation6], 64, 64, 4
    $region9: #{tpu_custom_call.1} parent=1 // pred_fallthru
      _
    // Predicated region
    $region10: #{tpu_custom_call.1} parent=1 // pred_check
      _
    $region11: #{tpu_custom_call.1} parent=1 // pred_check_branch
      %44 = sbr.rel (0) target = $region13
    $region12: #{tpu_custom_call.1} parent=1 // pred_region
      _
    $region13: #{tpu_custom_call.1} parent=1 // pred_fallthru
      _
    // Predicated region
    $region14: #{tpu_custom_call.1} parent=1 // pred_check
      _
    $region15: #{tpu_custom_call.1} parent=1 // pred_check_branch
      %46 = sbr.rel (0) target = $region17
    $region16: #{tpu_custom_call.1} parent=1 // pred_region
      %s48 = ssub.s32 1024, 1024
      %49 = vsyncadd [#allocation6], %s48
      %s50 = sshll.u32 [#allocation7], 4
      %s51 = int_to_ptr.vmem [resolvable:$true] %s50
      %56 = dma.hbm_to_vmem [thread:$0]  %s3, 1024, %s51, [#allocation6], 64, 64, 4
    $region17: #{tpu_custom_call.1} parent=1 // pred_fallthru
      _
    // Predicated region
    $region18: #{tpu_custom_call.1} parent=1 // pred_check
      _
    $region19: #{tpu_custom_call.1} parent=1 // pred_check_branch
      %58 = sbr.rel (0) target = $region21
    $region20: #{tpu_custom_call.1} parent=1 // pred_region
      _
    $region21: #{tpu_custom_call.1} parent=1 // pred_fallthru
      _
    // Predicated region
    $region22: #{tpu_custom_call.1} parent=1 // pred_check
      _
    $region23: #{tpu_custom_call.1} parent=1 // pred_check_branch
      %60 = sbr.rel (0) target = $region25
    $region24: #{tpu_custom_call.1} parent=1 // pred_region
      %s62 = ssub.s32 1024, 1024
      %63 = vsyncadd [#allocation9], %s62
      %s64 = sshll.u32 [#allocation8], 4
      %s65 = int_to_ptr.vmem [resolvable:$true] %s64
      %70 = dma.hbm_to_vmem [thread:$0]  %s5, 1024, %s65, [#allocation9], 64, 64, 4
    $region25: #{tpu_custom_call.1} parent=1 // pred_fallthru
      _
    // Predicated region
    $region26: #{tpu_custom_call.1} parent=1 // pred_check
      _
    $region27: #{tpu_custom_call.1} parent=1 // pred_check_branch
      %72 = sbr.rel (0) target = $region29
    $region28: #{tpu_custom_call.1} parent=1 // pred_region
      _
    $region29: #{tpu_custom_call.1} parent=1 // pred_fallthru
      _
    // Predicated region
    $region30: #{tpu_custom_call.1} parent=1 // pred_check
      _
    $region31: #{tpu_custom_call.1} parent=1 // pred_check_branch
      %74 = sbr.rel (0) target = $region33
    $region32: #{tpu_custom_call.1} parent=1 // pred_region
      %75 = dma.done [#allocation3], 256
    $region33: #{tpu_custom_call.1} parent=1 // pred_fallthru
      _
    // Predicated region
    $region34: #{tpu_custom_call.1} parent=1 // pred_check
      _
    $region35: #{tpu_custom_call.1} parent=1 // pred_check_branch
      %77 = sbr.rel (0) target = $region37
    $region36: #{tpu_custom_call.1} parent=1 // pred_region
      %78 = dma.done [#allocation6], 1024
    $region37: #{tpu_custom_call.1} parent=1 // pred_fallthru
      _
    // Predicated region
    $region38: #{tpu_custom_call.1} parent=1 // pred_check
      _
    $region39: #{tpu_custom_call.1} parent=1 // pred_check_branch
      %80 = sbr.rel (0) target = $region41
    $region40: #{tpu_custom_call.1} parent=1 // pred_region
      %81 = dma.done [#allocation6], 1024
    $region41: #{tpu_custom_call.1} parent=1 // pred_fallthru
      _
    // Predicated region
    $region42: #{tpu_custom_call.1} parent=1 // pred_check
      _
    $region43: #{tpu_custom_call.1} parent=1 // pred_check_branch
      %83 = sbr.rel (0) target = $region45
    $region44: #{tpu_custom_call.1} parent=1 // pred_region
      %84 = dma.done [#allocation9], 1024
    $region45: #{tpu_custom_call.1} parent=1 // pred_fallthru
      _
    %v86 = vld [vmem:[#allocation2] sm:$0xff]
    %v87 = vld [vmem:[#allocation2 + $0x8] sm:$0xff]
    %v88 = vpack.c.bf16 %v87, %v86
    %v89 = vld [vmem:[#allocation5] sm:$0xf]
    %v90 = vld [vmem:[#allocation5 + $0x4] sm:$0xf]
    %v91 = vld [vmem:[#allocation5 + $0x8] sm:$0xf]
    %v92 = vld [vmem:[#allocation5 + $0xc] sm:$0xf]
    %v93 = vld [vmem:[#allocation5 + $0x10] sm:$0xf]
    %v94 = vld [vmem:[#allocation5 + $0x14] sm:$0xf]
    %v95 = vld [vmem:[#allocation5 + $0x18] sm:$0xf]
    %v96 = vld [vmem:[#allocation5 + $0x1c] sm:$0xf]
    %v97 = vld [vmem:[#allocation5 + $0x20] sm:$0xf]
    %v98 = vld [vmem:[#allocation5 + $0x24] sm:$0xf]
    %v99 = vld [vmem:[#allocation5 + $0x28] sm:$0xf]
    %v100 = vld [vmem:[#allocation5 + $0x2c] sm:$0xf]
    %v101 = vld [vmem:[#allocation5 + $0x30] sm:$0xf]
    %v102 = vld [vmem:[#allocation5 + $0x34] sm:$0xf]
    %v103 = vld [vmem:[#allocation5 + $0x38] sm:$0xf]
    %v104 = vld [vmem:[#allocation5 + $0x3c] sm:$0xf]
    %v105 = vld [vmem:[%s2] sm:$0x1]
    %v107 = vlaneseq
    %v108 = vshrl.u32 %v107, 7
    %v109 = vsub.s32 0, %v108
    %v110 = vrot.slane %v105, %v109
    %v128 = vunpack.c.l.b16 %v89
    %v129 = vunpack.c.l.b16 %v90
    %v130 = vunpack.c.l.b16 %v91
    %v131 = vunpack.c.l.b16 %v92
    %v132 = vunpack.c.l.b16 %v93
    %v133 = vunpack.c.l.b16 %v94
    %v134 = vunpack.c.l.b16 %v95
    %v135 = vunpack.c.l.b16 %v96
    %v136 = vunpack.c.l.b16 %v97
    %v137 = vunpack.c.l.b16 %v98
    %v138 = vunpack.c.l.b16 %v99
    %v139 = vunpack.c.l.b16 %v100
    %v140 = vunpack.c.l.b16 %v101
    %v141 = vunpack.c.l.b16 %v102
    %v142 = vunpack.c.l.b16 %v103
    %v143 = vunpack.c.l.b16 %v104
    %v144 = vpack.c.b16 %v129, %v128
    %v145 = vpack.c.b16 %v131, %v130
    %v146 = vpack.c.b16 %v133, %v132
    %v147 = vpack.c.b16 %v135, %v134
    %v148 = vpack.c.b16 %v137, %v136
    %v149 = vpack.c.b16 %v139, %v138
    %v150 = vpack.c.b16 %v141, %v140
    %v151 = vpack.c.b16 %v143, %v142
    %160 = vmatprep.subr.bf16.mxu0 0
    %161 = vmatpush1.bf16.msra.mxu0 %v144
    %162 = vmatprep.subr.bf16.mxu0 0
    %163 = vmatpush1.bf16.msra.mxu0 %v145
    %164 = vmatprep.subr.bf16.mxu0 0
    %165 = vmatpush1.bf16.msra.mxu0 %v146
    %166 = vmatprep.subr.bf16.mxu0 0
    %167 = vmatpush1.bf16.msra.mxu0 %v147
    %168 = vmatprep.subr.bf16.mxu0 0
    %169 = vmatpush1.bf16.msra.mxu0 %v148
    %170 = vmatprep.subr.bf16.mxu0 0
    %171 = vmatpush1.bf16.msra.mxu0 %v149
    %172 = vmatprep.subr.bf16.mxu0 0
    %173 = vmatpush1.bf16.msra.mxu0 %v150
    %174 = vmatprep.subr.bf16.mxu0 0
    %175 = vmatpush1.bf16.msra.mxu0 %v151
    %176 = vmatprep.subr.bf16.mxu0 0
    %177 = vmatpush1.bf16.msra.mxu0 0
    %178 = vmatprep.subr.bf16.mxu0 0
    %179 = vmatpush1.bf16.msra.mxu0 0
    %180 = vmatprep.subr.bf16.mxu0 0
    %181 = vmatpush1.bf16.msra.mxu0 0
    %182 = vmatprep.subr.bf16.mxu0 0
    %183 = vmatpush1.bf16.msra.mxu0 0
    %184 = vmatprep.subr.bf16.mxu0 0
    %185 = vmatpush1.bf16.msra.mxu0 0
    %186 = vmatprep.subr.bf16.mxu0 0
    %187 = vmatpush1.bf16.msra.mxu0 0
    %188 = vmatprep.subr.bf16.mxu0 0
    %189 = vmatpush1.bf16.msra.mxu0 0
    %190 = vmatprep.subr.bf16.mxu0 0
    %191 = vmatpush1.bf16.msra.mxu0 0
    %192 = vmatprep.mubr.bf16.mxu0 0
    %193 = vmatmul.mubr.bf16.gmra.mrb[0].mxu0 %v88
    %v194 = vpop.f32.mrb[0].mxu0
    %v195 = vadd.f32 %v110, %v194
    %v196 = vpop.f32.mrb[0].mxu0
    %v197 = vpop.f32.mrb[0].mxu0
    %v198 = vadd.f32 %v110, %v197
    %v199 = vpop.f32.mrb[0].mxu0
    %200 = vdwg.mxu0
    %v201 = vmax.f32 %v195, 0.0
    %v202 = vmax.f32 %v198, 0.0
    %v203 = vpack.c.bf16 %v202, %v201
    %v204 = vld [vmem:[#allocation7] sm:$0xf]
    %v205 = vld [vmem:[#allocation7 + $0x4] sm:$0xf]
    %v206 = vld [vmem:[#allocation7 + $0x8] sm:$0xf]
    %v207 = vld [vmem:[#allocation7 + $0xc] sm:$0xf]
    %v208 = vld [vmem:[#allocation7 + $0x10] sm:$0xf]
    %v209 = vld [vmem:[#allocation7 + $0x14] sm:$0xf]
    %v210 = vld [vmem:[#allocation7 + $0x18] sm:$0xf]
    %v211 = vld [vmem:[#allocation7 + $0x1c] sm:$0xf]
    %v212 = vld [vmem:[#allocation7 + $0x20] sm:$0xf]
    %v213 = vld [vmem:[#allocation7 + $0x24] sm:$0xf]
    %v214 = vld [vmem:[#allocation7 + $0x28] sm:$0xf]
    %v215 = vld [vmem:[#allocation7 + $0x2c] sm:$0xf]
    %v216 = vld [vmem:[#allocation7 + $0x30] sm:$0xf]
    %v217 = vld [vmem:[#allocation7 + $0x34] sm:$0xf]
    %v218 = vld [vmem:[#allocation7 + $0x38] sm:$0xf]
    %v219 = vld [vmem:[#allocation7 + $0x3c] sm:$0xf]
    %v220 = vld [vmem:[%s4] sm:$0x1]
    %v222 = vlaneseq
    %v223 = vshrl.u32 %v222, 7
    %v224 = vsub.s32 0, %v223
    %v225 = vrot.slane %v220, %v224
    %v243 = vunpack.c.l.b16 %v204
    %v244 = vunpack.c.l.b16 %v205
    %v245 = vunpack.c.l.b16 %v206
    %v246 = vunpack.c.l.b16 %v207
    %v247 = vunpack.c.l.b16 %v208
    %v248 = vunpack.c.l.b16 %v209
    %v249 = vunpack.c.l.b16 %v210
    %v250 = vunpack.c.l.b16 %v211
    %v251 = vunpack.c.l.b16 %v212
    %v252 = vunpack.c.l.b16 %v213
    %v253 = vunpack.c.l.b16 %v214
    %v254 = vunpack.c.l.b16 %v215
    %v255 = vunpack.c.l.b16 %v216
    %v256 = vunpack.c.l.b16 %v217
    %v257 = vunpack.c.l.b16 %v218
    %v258 = vunpack.c.l.b16 %v219
    %v259 = vpack.c.b16 %v244, %v243
    %v260 = vpack.c.b16 %v246, %v245
    %v261 = vpack.c.b16 %v248, %v247
    %v262 = vpack.c.b16 %v250, %v249
    %v263 = vpack.c.b16 %v252, %v251
    %v264 = vpack.c.b16 %v254, %v253
    %v265 = vpack.c.b16 %v256, %v255
    %v266 = vpack.c.b16 %v258, %v257
    %275 = vmatprep.subr.bf16.mxu0 0
    %276 = vmatpush1.bf16.msra.mxu0 %v259
    %277 = vmatprep.subr.bf16.mxu0 0
    %278 = vmatpush1.bf16.msra.mxu0 %v260
    %279 = vmatprep.subr.bf16.mxu0 0
    %280 = vmatpush1.bf16.msra.mxu0 %v261
    %281 = vmatprep.subr.bf16.mxu0 0
    %282 = vmatpush1.bf16.msra.mxu0 %v262
    %283 = vmatprep.subr.bf16.mxu0 0
    %284 = vmatpush1.bf16.msra.mxu0 %v263
    %285 = vmatprep.subr.bf16.mxu0 0
    %286 = vmatpush1.bf16.msra.mxu0 %v264
    %287 = vmatprep.subr.bf16.mxu0 0
    %288 = vmatpush1.bf16.msra.mxu0 %v265
    %289 = vmatprep.subr.bf16.mxu0 0
    %290 = vmatpush1.bf16.msra.mxu0 %v266
    %291 = vmatprep.subr.bf16.mxu0 0
    %292 = vmatpush1.bf16.msra.mxu0 0
    %293 = vmatprep.subr.bf16.mxu0 0
    %294 = vmatpush1.bf16.msra.mxu0 0
    %295 = vmatprep.subr.bf16.mxu0 0
    %296 = vmatpush1.bf16.msra.mxu0 0
    %297 = vmatprep.subr.bf16.mxu0 0
    %298 = vmatpush1.bf16.msra.mxu0 0
    %299 = vmatprep.subr.bf16.mxu0 0
    %300 = vmatpush1.bf16.msra.mxu0 0
    %301 = vmatprep.subr.bf16.mxu0 0
    %302 = vmatpush1.bf16.msra.mxu0 0
    %303 = vmatprep.subr.bf16.mxu0 0
    %304 = vmatpush1.bf16.msra.mxu0 0
    %305 = vmatprep.subr.bf16.mxu0 0
    %306 = vmatpush1.bf16.msra.mxu0 0
    %307 = vmatprep.mubr.bf16.mxu0 0
    %308 = vmatmul.mubr.bf16.gmra.mrb[0].mxu0 %v203
    %v309 = vpop.f32.mrb[0].mxu0
    %v310 = vadd.f32 %v225, %v309
    %v311 = vpop.f32.mrb[0].mxu0
    %v312 = vpop.f32.mrb[0].mxu0
    %v313 = vadd.f32 %v225, %v312
    %v314 = vpop.f32.mrb[0].mxu0
    %315 = vdwg.mxu0
    %v316 = vmax.f32 %v310, 0.0
    %v317 = vmax.f32 %v313, 0.0
    %v318 = vpack.c.bf16 %v317, %v316
    %319 = vst [vmem:[#allocation10] sm:$0xff] %v316
    %320 = vst [vmem:[#allocation10 + $0x8] sm:$0xff] %v317
    %v321 = vld [vmem:[#allocation8] sm:$0xf]
    %v322 = vld [vmem:[#allocation8 + $0x4] sm:$0xf]
    %v323 = vld [vmem:[#allocation8 + $0x8] sm:$0xf]
    %v324 = vld [vmem:[#allocation8 + $0xc] sm:$0xf]
    %v325 = vld [vmem:[#allocation8 + $0x10] sm:$0xf]
    %v326 = vld [vmem:[#allocation8 + $0x14] sm:$0xf]
    %v327 = vld [vmem:[#allocation8 + $0x18] sm:$0xf]
    %v328 = vld [vmem:[#allocation8 + $0x1c] sm:$0xf]
    %v329 = vld [vmem:[#allocation8 + $0x20] sm:$0xf]
    %v330 = vld [vmem:[#allocation8 + $0x24] sm:$0xf]
    %v331 = vld [vmem:[#allocation8 + $0x28] sm:$0xf]
    %v332 = vld [vmem:[#allocation8 + $0x2c] sm:$0xf]
    %v333 = vld [vmem:[#allocation8 + $0x30] sm:$0xf]
    %v334 = vld [vmem:[#allocation8 + $0x34] sm:$0xf]
    %v335 = vld [vmem:[#allocation8 + $0x38] sm:$0xf]
    %v336 = vld [vmem:[#allocation8 + $0x3c] sm:$0xf]
    %v337 = vld [vmem:[%s6] sm:$0x1]
    %v339 = vlaneseq
    %v340 = vshrl.u32 %v339, 7
    %v341 = vsub.s32 0, %v340
    %v342 = vrot.slane %v337, %v341
    %v360 = vunpack.c.l.b16 %v321
    %v361 = vunpack.c.l.b16 %v322
    %v362 = vunpack.c.l.b16 %v323
    %v363 = vunpack.c.l.b16 %v324
    %v364 = vunpack.c.l.b16 %v325
    %v365 = vunpack.c.l.b16 %v326
    %v366 = vunpack.c.l.b16 %v327
    %v367 = vunpack.c.l.b16 %v328
    %v368 = vunpack.c.l.b16 %v329
    %v369 = vunpack.c.l.b16 %v330
    %v370 = vunpack.c.l.b16 %v331
    %v371 = vunpack.c.l.b16 %v332
    %v372 = vunpack.c.l.b16 %v333
    %v373 = vunpack.c.l.b16 %v334
    %v374 = vunpack.c.l.b16 %v335
    %v375 = vunpack.c.l.b16 %v336
    %v376 = vpack.c.b16 %v361, %v360
    %v377 = vpack.c.b16 %v363, %v362
    %v378 = vpack.c.b16 %v365, %v364
    %v379 = vpack.c.b16 %v367, %v366
    %v380 = vpack.c.b16 %v369, %v368
    %v381 = vpack.c.b16 %v371, %v370
    %v382 = vpack.c.b16 %v373, %v372
    %v383 = vpack.c.b16 %v375, %v374
    %392 = vmatprep.subr.bf16.mxu0 0
    %393 = vmatpush1.bf16.msra.mxu0 %v376
    %394 = vmatprep.subr.bf16.mxu0 0
    %395 = vmatpush1.bf16.msra.mxu0 %v377
    %396 = vmatprep.subr.bf16.mxu0 0
    %397 = vmatpush1.bf16.msra.mxu0 %v378
    %398 = vmatprep.subr.bf16.mxu0 0
    %399 = vmatpush1.bf16.msra.mxu0 %v379
    %400 = vmatprep.subr.bf16.mxu0 0
    %401 = vmatpush1.bf16.msra.mxu0 %v380
    %402 = vmatprep.subr.bf16.mxu0 0
    %403 = vmatpush1.bf16.msra.mxu0 %v381
    %404 = vmatprep.subr.bf16.mxu0 0
    %405 = vmatpush1.bf16.msra.mxu0 %v382
    %406 = vmatprep.subr.bf16.mxu0 0
    %407 = vmatpush1.bf16.msra.mxu0 %v383
    %408 = vmatprep.subr.bf16.mxu0 0
    %409 = vmatpush1.bf16.msra.mxu0 0
    %410 = vmatprep.subr.bf16.mxu0 0
    %411 = vmatpush1.bf16.msra.mxu0 0
    %412 = vmatprep.subr.bf16.mxu0 0
    %413 = vmatpush1.bf16.msra.mxu0 0
    %414 = vmatprep.subr.bf16.mxu0 0
    %415 = vmatpush1.bf16.msra.mxu0 0
    %416 = vmatprep.subr.bf16.mxu0 0
    %417 = vmatpush1.bf16.msra.mxu0 0
    %418 = vmatprep.subr.bf16.mxu0 0
    %419 = vmatpush1.bf16.msra.mxu0 0
    %420 = vmatprep.subr.bf16.mxu0 0
    %421 = vmatpush1.bf16.msra.mxu0 0
    %422 = vmatprep.subr.bf16.mxu0 0
    %423 = vmatpush1.bf16.msra.mxu0 0
    %424 = vmatprep.mubr.bf16.mxu0 0
    %425 = vmatmul.mubr.bf16.gmra.mrb[0].mxu0 %v318
    %v426 = vpop.f32.mrb[0].mxu0
    %v427 = vadd.f32 %v342, %v426
    %v428 = vpop.f32.mrb[0].mxu0
    %v429 = vpop.f32.mrb[0].mxu0
    %v430 = vadd.f32 %v342, %v429
    %v431 = vpop.f32.mrb[0].mxu0
    %432 = vdwg.mxu0
    %433 = vst [vmem:[#allocation11] sm:$0xff] %v427
    %434 = vst [vmem:[#allocation11 + $0x8] sm:$0xff] %v430
    // Predicated region
    $region46: #{tpu_custom_call.1} parent=1 // pred_check
      _
    $region47: #{tpu_custom_call.1} parent=1 // pred_check_branch
      %436 = sbr.rel (0) target = $region49
    $region48: #{tpu_custom_call.1} parent=1 // pred_region
      %s438 = ssub.s32 256, 256
      %439 = vsyncadd [#allocation4], %s438
      %s440 = sshll.u32 [#allocation10], 4
      %s441 = int_to_ptr.vmem [resolvable:$true] %s440
      %446 = dma.vmem_to_hbm [thread:$0]  %s441, 256, %s7, [#allocation4], 128, 128, 8
    $region49: #{tpu_custom_call.1} parent=1 // pred_fallthru
      _
    // Predicated region
    $region50: #{tpu_custom_call.1} parent=1 // pred_check
      _
    $region51: #{tpu_custom_call.1} parent=1 // pred_check_branch
      %448 = sbr.rel (0) target = $region53
    $region52: #{tpu_custom_call.1} parent=1 // pred_region
      %s450 = ssub.s32 256, 256
      %451 = vsyncadd [#allocation12], %s450
      %s452 = sshll.u32 [#allocation11], 4
      %s453 = int_to_ptr.vmem [resolvable:$true] %s452
      %458 = dma.vmem_to_hbm [thread:$0]  %s453, 256, %s8, [#allocation12], 128, 128, 8
    $region53: #{tpu_custom_call.1} parent=1 // pred_fallthru
      _
    // Predicated region
    $region54: #{tpu_custom_call.1} parent=1 // pred_check
      _
    $region55: #{tpu_custom_call.1} parent=1 // pred_check_branch
      %460 = sbr.rel (0) target = $region57
    $region56: #{tpu_custom_call.1} parent=1 // pred_region
      %461 = dma.done [#allocation4], 256
    $region57: #{tpu_custom_call.1} parent=1 // pred_fallthru
      _
    // Predicated region
    $region58: #{tpu_custom_call.1} parent=1 // pred_check
      _
    $region59: #{tpu_custom_call.1} parent=1 // pred_check_branch
      %463 = sbr.rel (0) target = $region61
    $region60: #{tpu_custom_call.1} parent=1 // pred_region
      %464 = dma.done [#allocation12], 256
    $region61: #{tpu_custom_call.1} parent=1 // pred_fallthru
      _
    %465 = vsyncpa [#allocation3], 1
    %466 = vsyncpa [#allocation6], 1
    %467 = vsyncpa [#allocation9], 1
    %468 = vsyncpa [#allocation4], 1
    %469 = vsyncpa [#allocation12], 1

</llo_original>
